<compile_context>
chip_gen: v6e
topology: v6e:2x2x1
jax: 0.10.0
libtpu: 0.0.40
codegen_flags: <defaults>
</compile_context>

<pallas_src>
import functools

import jax
import jax.numpy as jnp
import numpy as np
from jax import lax
from jax.experimental import pallas as pl
from jax.experimental.pallas import tpu as pltpu


_TARGET_BLOCK_BYTES = 4 * 1024 * 1024   # ~4 MiB per input block (x2 double-buffered)
_MAX_VMEM_LIMIT = 48 * 1024 * 1024      # stay under v7x's 64 MiB physical VMEM


def _sublane_mult(dtype):
    # Native VMEM tile heights: f32 -> 8, bf16/f16 -> 16, int8/fp8 -> 32.
    return max(8, 32 // max(1, jnp.dtype(dtype).itemsize))


def _round_down(v, m):
    return max(m, (v // m) * m)


def _round_up(v, m):
    return -(-v // m) * m


def _split_for_two_cores(t, full, mult):
    """If one block would cover the whole (parallel) axis, halve it (when the
    halves stay legal multiples of `mult`) so v7x's two TensorCores both work."""
    if t >= full:
        if full >= 2 * mult:
            return min(_round_up(-(-full // 2), mult), full)
        return full
    return t


def _compiler_params(semantics, live_bytes):
    vmem = int(min(max(live_bytes + (4 << 20), 32 << 20), _MAX_VMEM_LIMIT))
    return pltpu.CompilerParams(dimension_semantics=semantics,
                                vmem_limit_bytes=vmem)


# --------------------------------------------------------------------------- #
# Kernels
# --------------------------------------------------------------------------- #
def _mean_small_k_kernel(x_ref, o_ref, *, k, n, inv_k):
    # x_ref: (TM, K*N) contiguous view; o_ref: (TM, N).
    # K lane-aligned slices summed with plain VPU adds: one dense DMA per block,
    # full sublanes, lane-dense output stores.
    acc = x_ref[:, 0:n].astype(jnp.float32)
    for kk in range(1, k):
        acc = acc + x_ref[:, kk * n:(kk + 1) * n].astype(jnp.float32)
    o_ref[...] = (acc * inv_k).astype(o_ref.dtype)


def _mean_last_kernel(x_ref, o_ref, acc_ref, *, inv_k, k_total, tk, ragged):
    # x_ref: (TM, TK) -> reduce the lane axis into a (TM,) f32 accumulator.
    k_id = pl.program_id(1)

    @pl.when(k_id == 0)
    def _():
        acc_ref[...] = jnp.zeros_like(acc_ref)

    x = x_ref[...].astype(jnp.float32)
    if ragged:  # mask the padded tail of the final (partial) K block
        col = lax.broadcasted_iota(jnp.int32, x.shape, 1) + k_id * tk
        x = jnp.where(col < k_total, x, 0.0)
    acc_ref[...] += jnp.sum(x, axis=1)

    @pl.when(k_id == pl.num_programs(1) - 1)
    def _():
        o_ref[...] = (acc_ref[...] * inv_k).astype(o_ref.dtype)


def _mean_mid_kernel(x_ref, o_ref, acc_ref, *, inv_k, k_total, tk, ragged):
    # x_ref: (TM, TK, TN) -> reduce the sublane (K) axis into a (TM, TN) f32 acc.
    k_id = pl.program_id(2)

    @pl.when(k_id == 0)
    def _():
        acc_ref[...] = jnp.zeros_like(acc_ref)

    x = x_ref[...].astype(jnp.float32)
    if ragged:  # mask the padded tail of the final (partial) K block
        row = lax.broadcasted_iota(jnp.int32, x.shape, 1) + k_id * tk
        x = jnp.where(row < k_total, x, 0.0)
    acc_ref[...] += jnp.sum(x, axis=1)

    @pl.when(k_id == pl.num_programs(2) - 1)
    def _():
        o_ref[...] = (acc_ref[...] * inv_k).astype(o_ref.dtype)


# --------------------------------------------------------------------------- #
# Wrapper
# --------------------------------------------------------------------------- #
@functools.partial(jax.jit, static_argnames=("dim",))
def mean_pallas(x, dim):
    """Equivalent of torch.mean(x, dim) using Pallas TPU kernels."""
    ndim = x.ndim
    dim = dim % ndim
    shape = x.shape
    out_full_shape = shape[:dim] + shape[dim + 1:]

    K = int(shape[dim])
    M = int(np.prod(shape[:dim], dtype=np.int64)) if dim > 0 else 1
    N = int(np.prod(shape[dim + 1:], dtype=np.int64)) if dim < ndim - 1 else 1

    itemsize = x.dtype.itemsize
    inv_k = 1.0 / K
    sub = _sublane_mult(x.dtype)
    budget = _TARGET_BLOCK_BYTES

    # torch.mean only accepts floating inputs; promote everything else to f32.
    out_dtype = x.dtype if jnp.issubdtype(x.dtype, jnp.floating) else jnp.float32
    out_isize = jnp.dtype(out_dtype).itemsize
    cost = pl.CostEstimate(flops=M * K * N, transcendentals=0,
                           bytes_accessed=x.size * itemsize + M * N * out_isize)

    # ---------------- Reduce the last (lane) axis (or anything with N == 1). --
    if N == 1:
        x2 = x.reshape(M, K)
        rows_min = min(M, 128)          # 1-D output block must be mult-of-128 or full M
        if rows_min * K * itemsize <= budget:
            TK = K
        else:
            # K too large for one block even at minimal rows -> tile the reduction.
            TK = _round_down(min(budget // (rows_min * itemsize), 131072), 128)
        TM = budget // max(1, TK * itemsize)
        TM = M if TM >= M else _round_down(TM, 128)
        TM = _split_for_two_cores(TM, M, 128)
        ragged = (K % TK) != 0
        grid = (pl.cdiv(M, TM), pl.cdiv(K, TK))
        live = 2 * TM * TK * itemsize + 2 * TM * out_isize + TM * 4

        out = pl.pallas_call(
            functools.partial(_mean_last_kernel, inv_k=inv_k, k_total=K,
                              tk=TK, ragged=ragged),
            out_shape=jax.ShapeDtypeStruct((M,), out_dtype),
            grid=grid,
            in_specs=[pl.BlockSpec((TM, TK), lambda i, k: (i, k))],
            out_specs=pl.BlockSpec((TM,), lambda i, k: (i,)),
            scratch_shapes=[pltpu.VMEM((TM,), jnp.float32)],
            compiler_params=_compiler_params(("parallel", "arbitrary"), live),
            cost_estimate=cost,
        )(x2)
        return out.reshape(out_full_shape)

    # ---------------- Small-K fast path (e.g. NCHW channel mean, K=4). -------
    if K <= sub and N % 128 == 0 and sub * K * N * itemsize <= budget:
        x2 = x.reshape(M, K * N)        # matches contiguous HBM layout exactly
        TM = budget // max(1, K * N * itemsize)
        TM = M if TM >= M else _round_down(TM, sub)
        TM = _split_for_two_cores(TM, M, sub)
        grid = (pl.cdiv(M, TM),)
        live = 2 * TM * K * N * itemsize + 2 * TM * N * out_isize

        out = pl.pallas_call(
            functools.partial(_mean_small_k_kernel, k=K, n=N, inv_k=inv_k),
            out_shape=jax.ShapeDtypeStruct((M, N), out_dtype),
            grid=grid,
            in_specs=[pl.BlockSpec((TM, K * N), lambda i: (i, 0))],
            out_specs=pl.BlockSpec((TM, N), lambda i: (i, 0)),
            compiler_params=_compiler_params(("parallel",), live),
            cost_estimate=cost,
        )(x2)
        return out.reshape(out_full_shape)

    # ---------------- General interior / leading axis: (M, K, N) view. -------
    x3 = x.reshape(M, K, N)

    # Lane tile: prefer wide, lane-dense output blocks (>= 2 KiB row chunks).
    cands = ([N] if N <= 2048 else []) + [c for c in (2048, 1024, 512) if c < N]
    TN = TK = None
    for c in cands:
        if sub * K * c * itemsize <= budget:
            TN, TK = c, K
            break
    if TK is None:
        # Full K does not fit even at the narrowest sensible lane tile ->
        # tile the reduction axis (bounded VMEM on all TPU generations).
        TN = N if N <= 512 else 512
        TK = min(_round_down(budget // max(1, sub * TN * itemsize), sub), K)
    ragged = (K % TK) != 0

    TM = budget // max(1, TK * TN * itemsize)
    TM = M if TM >= M else _round_down(TM, sub)
    TM = _split_for_two_cores(TM, M, sub)
    if pl.cdiv(M, TM) == 1 and TN >= N and N >= 256:
        TN = _round_up(-(-N // 2), 128)   # give the second TensorCore lane blocks

    grid = (pl.cdiv(M, TM), pl.cdiv(N, TN), pl.cdiv(K, TK))
    live = 2 * TM * TK * TN * itemsize + 2 * TM * TN * out_isize + TM * TN * 4

    out = pl.pallas_call(
        functools.partial(_mean_mid_kernel, inv_k=inv_k, k_total=K,
                          tk=TK, ragged=ragged),
        out_shape=jax.ShapeDtypeStruct((M, N), out_dtype),
        grid=grid,
        in_specs=[pl.BlockSpec((TM, TK, TN), lambda i, j, k: (i, k, j))],
        out_specs=pl.BlockSpec((TM, TN), lambda i, j, k: (i, j)),
        scratch_shapes=[pltpu.VMEM((TM, TN), jnp.float32)],
        compiler_params=_compiler_params(("parallel", "parallel", "arbitrary"), live),
        cost_estimate=cost,
    )(x3)
    return out.reshape(out_full_shape)


class Mean:
    """Drop-in equivalent of the PyTorch Mean(dim) module."""

    def __init__(self, dim):
        self.dim = dim

    def __call__(self, x):
        return mean_pallas(x, self.dim)


if __name__ == "__main__":
    key = jax.random.PRNGKey(0)
    # NCHW input, like the PyTorch module would see from a conv stack.
    x = jax.random.normal(key, (2, 4, 16, 16), dtype=jnp.float32)

    # Primary use: Mean(dim=1) -> average over channels -> (2, 16, 16).
    mean_mod = Mean(dim=1)
    y = jax.block_until_ready(mean_mod(x))
    y_ref = jnp.mean(x, axis=1)
    assert y.shape == y_ref.shape, (y.shape, y_ref.shape)
    assert y.dtype == y_ref.dtype, (y.dtype, y_ref.dtype)
    np.testing.assert_allclose(np.asarray(y), np.asarray(y_ref),
                               rtol=1e-5, atol=1e-5)

    # Other reduction axes exercise the last-axis and general interior paths.
    for d in (0, 2, 3):
        yd = jax.block_until_ready(mean_pallas(x, dim=d))
        yd_ref = jnp.mean(x, axis=d)
        assert yd.shape == yd_ref.shape, (d, yd.shape, yd_ref.shape)
        np.testing.assert_allclose(np.asarray(yd), np.asarray(yd_ref),
                                   rtol=1e-5, atol=1e-5)

    print("KERNEL_OK")
</pallas_src>

<mosaic_0001>
module attributes {stable_mosaic.version = 11 : i64} {
  func.func @_mean_small_k_kernel(%arg0: i32, %arg1: memref<2x1024xf32, #tpu.memory_space<vmem>>, %arg2: memref<2x256xf32, #tpu.memory_space<vmem>>) attributes {dimension_semantics = [#tpu.dimension_semantics<parallel>], iteration_bounds = array<i64: 1>, scalar_prefetch = 0 : i64, scratch_operands = 0 : i64, tpu.core_type = #tpu.core_type<tc>, window_params = [{transform_indices = @transform_0, window_bounds = array<i64: 2, 1024>}, {transform_indices = @transform_1, window_bounds = array<i64: 2, 256>}]} {
    %c0 = arith.constant 0 : index
    %c0_0 = arith.constant 0 : index
    %0 = vector.load %arg1[%c0, %c0_0] : memref<2x1024xf32, #tpu.memory_space<vmem>>, vector<2x256xf32>
    %c0_1 = arith.constant 0 : index
    %c256 = arith.constant 256 : index
    %1 = vector.load %arg1[%c0_1, %c256] : memref<2x1024xf32, #tpu.memory_space<vmem>>, vector<2x256xf32>
    %2 = arith.addf %0, %1 : vector<2x256xf32>
    %c0_2 = arith.constant 0 : index
    %c512 = arith.constant 512 : index
    %3 = vector.load %arg1[%c0_2, %c512] : memref<2x1024xf32, #tpu.memory_space<vmem>>, vector<2x256xf32>
    %4 = arith.addf %2, %3 : vector<2x256xf32>
    %c0_3 = arith.constant 0 : index
    %c768 = arith.constant 768 : index
    %5 = vector.load %arg1[%c0_3, %c768] : memref<2x1024xf32, #tpu.memory_space<vmem>>, vector<2x256xf32>
    %6 = arith.addf %4, %5 : vector<2x256xf32>
    %cst = arith.constant 2.500000e-01 : f32
    %7 = vector.broadcast %cst : f32 to vector<2x256xf32>
    %8 = arith.mulf %6, %7 : vector<2x256xf32>
    %c0_4 = arith.constant 0 : index
    %c0_5 = arith.constant 0 : index
    %9 = vector.load %arg2[%c0_4, %c0_5] : memref<2x256xf32, #tpu.memory_space<vmem>>, vector<2x256xf32>
    tpu.vector_store %arg2[%c0_4, %c0_5], %8 {strides = array<i32>} : memref<2x256xf32, #tpu.memory_space<vmem>>, vector<2x256xf32>,
    return
  }
  func.func @transform_0(%arg0: i32) -> (i32, i32) {
    %c0_i32 = arith.constant 0 : i32
    %c0_i32_0 = arith.constant 0 : i32
    return %arg0, %c0_i32 : i32, i32
  }
  func.func @transform_1(%arg0: i32) -> (i32, i32) {
    %c0_i32 = arith.constant 0 : i32
    %c0_i32_0 = arith.constant 0 : i32
    return %arg0, %c0_i32 : i32, i32
  }
}

</mosaic_0001>

<llo_original>
// kernel: mean_pallas.1
$region0: #{mean_pallas.1}
  #allocation0 [shape = 'u32[]', space=smem, size = 0x4, offset = 0x4, fixed_abs, tag = 'smem constant byte address 0x4 - core index']
  #allocation1 [shape = 'u32[144,128]{1,0:T(1,128)}', space=vmem, size = 0x12000, scoped, tag = 'internal scratch']
  %s0 = inlined_call_operand.vmem [shape: f32[2,1024], index: 0, kind: input, shape index: {}]
  %s1 = inlined_call_operand.vmem [shape: f32[2,256], index: 1, kind: output, shape index: {}]
  %s2 = sld [smem:[#allocation0]]
  $region14: #{mean_pallas.1} parent=0
    _
  %s4 = ssub.s32 1, %s2
  %s5 = scalar_select 0, %s4, %s2
  // Predicated region
  $region2: #{mean_pallas.1} parent=0 // pred_check
    _
  $region3: #{mean_pallas.1} parent=0 // pred_check_branch
    %7 = sbr.rel (0) target = $region5
  $region4: #{mean_pallas.1} parent=0 // pred_region
    _
  $region5: #{mean_pallas.1} parent=0 // pred_fallthru
    _
  %v8 = vld [vmem:[%s0] sm:$0xf]
  %v9 = vld [vmem:[%s0 + $0x4] sm:$0xf]
  %v10 = vadd.f32 %v8, %v9
  %v11 = vld [vmem:[%s0 + $0x8] sm:$0xf]
  %v12 = vadd.f32 %v10, %v11
  %v13 = vld [vmem:[%s0 + $0xc] sm:$0xf]
  %v14 = vadd.f32 %v12, %v13
  %v15 = vmul.f32 %v14, 0.25
  %16 = vst [vmem:[%s1] sm:$0xf] %v15
  // Predicated region
  $region6: #{mean_pallas.1} parent=0 // pred_check
    _
  $region7: #{mean_pallas.1} parent=0 // pred_check_branch
    %18 = sbr.rel (0) target = $region9
  $region8: #{mean_pallas.1} parent=0 // pred_region
    _
  $region9: #{mean_pallas.1} parent=0 // pred_fallthru
    _
  // Predicated region
  $region10: #{mean_pallas.1} parent=0 // pred_check
    _
  $region11: #{mean_pallas.1} parent=0 // pred_check_branch
    %20 = sbr.rel (0) target = $region13
  $region12: #{mean_pallas.1} parent=0 // pred_region
    _
  $region13: #{mean_pallas.1} parent=0 // pred_fallthru
    _

</llo_original>
